<compile_context>
chip_gen: v6e
topology: v6e:2x2x1
jax: 0.10.0
libtpu: 0.0.40
codegen_flags: <defaults>
</compile_context>

<pallas_src>
import functools

import jax
import jax.numpy as jnp
from jax.experimental import pallas as pl
from jax.experimental.pallas import tpu as pltpu

BN_EPS = 1e-5
LANE = 128  # lane-dense feature width


# ----------------------------------------------------------------------------
# Kernel: 3 operands in, 1 out.  Everything lives in VMEM as whole blocks.
#   x_ref   : (batch, LANE)       padded states
#   w_ref   : (3, LANE, LANE)     w1 | w2 | w3, each zero-padded to 128x128
#   vec_ref : (9, LANE)           rows: b1,g1,be1,b2,g2,be2,b3,scale,loc
#   o_ref   : (batch, LANE)       padded actions (cols >= action_dim are 0)
# ----------------------------------------------------------------------------
def actor_kernel(x_ref, w_ref, vec_ref, o_ref):
    x = x_ref[...]

    def row(i):
        # static slice of the packed vector slab -> (1, LANE), zero cost
        return vec_ref[i:i + 1, :]

    def linear(h, layer, bias_row):
        return jnp.dot(h, w_ref[layer],
                       preferred_element_type=jnp.float32) + row(bias_row)

    def bn_relu(h, gamma_row, beta_row):
        # training-mode BatchNorm1d with biased batch variance, fused form:
        #   a = gamma * rsqrt(var + eps);  out = a * (h - mean) + beta
        mean = jnp.mean(h, axis=0, keepdims=True)
        centered = h - mean                       # reused for var and normalize
        var = jnp.mean(centered * centered, axis=0, keepdims=True)
        a = row(gamma_row) * jax.lax.rsqrt(var + BN_EPS)
        return jnp.maximum(a * centered + row(beta_row), 0.0)

    # hidden layer 1: Linear -> BN -> ReLU
    h = bn_relu(linear(x, 0, 0), 1, 2)
    # hidden layer 2: Linear -> BN -> ReLU
    h = bn_relu(linear(h, 1, 3), 4, 5)
    # output layer: Linear, then scale * tanh + loc
    h = linear(h, 2, 6)
    o_ref[...] = row(7) * jnp.tanh(h) + row(8)


# ----------------------------------------------------------------------------
# Host-side packing + wrapper
# ----------------------------------------------------------------------------
def _pad2(a, rows, cols):
    return jnp.pad(a, ((0, rows - a.shape[0]), (0, cols - a.shape[1])))


def pack_operands(x, params, scale, loc):
    """Pack 13 small arrays into 3 lane-dense slabs (one DMA each)."""
    (w1, b1, g1, be1, w2, b2, g2, be2, w3, b3) = params
    x_p = _pad2(x, x.shape[0], LANE)
    w_slab = jnp.stack([_pad2(w1, LANE, LANE),
                        _pad2(w2, LANE, LANE),
                        _pad2(w3, LANE, LANE)], axis=0)
    rows = [b1, g1, be1, b2, g2, be2, b3, scale, loc]
    vec_slab = jnp.concatenate([_pad2(r, 1, LANE) for r in rows], axis=0)
    return x_p, w_slab, vec_slab


@functools.partial(jax.jit, static_argnames=("action_dim",))
def actor_forward(x, params, scale, loc, *, action_dim):
    batch = x.shape[0]
    x_p, w_slab, vec_slab = pack_operands(x, params, scale, loc)
    vmem = pl.BlockSpec(memory_space=pltpu.MemorySpace.VMEM)
    out = pl.pallas_call(
        actor_kernel,
        out_shape=jax.ShapeDtypeStruct((batch, LANE), jnp.float32),
        in_specs=[vmem, vmem, vmem],
        out_specs=vmem,
    )(x_p, w_slab, vec_slab)
    return out[:, :action_dim]
    # TODO(synk): for large batches on v7x, grid over replicas (BN's full-batch
    # stats prevent naive batch tiling) and mark that axis "parallel".


# ----------------------------------------------------------------------------
# Init + pure-JAX reference
# ----------------------------------------------------------------------------
def init_params(key, state_dim, hidden_sizes, action_dim):
    """Deterministic synthetic initialization (uniform, PyTorch-Linear-like bound)."""
    sizes = [state_dim] + list(hidden_sizes) + [action_dim]
    params = []
    keys = jax.random.split(key, 2 * (len(sizes) - 1))
    for i in range(len(sizes) - 1):
        fan_in, fan_out = sizes[i], sizes[i + 1]
        bound = 1.0 / jnp.sqrt(fan_in)
        w = jax.random.uniform(keys[2 * i], (fan_in, fan_out),
                               minval=-bound, maxval=bound, dtype=jnp.float32)
        b = jax.random.uniform(keys[2 * i + 1], (1, fan_out),
                               minval=-bound, maxval=bound, dtype=jnp.float32)
        params.append(w)
        params.append(b)
        if i != len(sizes) - 2:
            # BatchNorm1d default init: gamma=1, beta=0
            params.append(jnp.ones((1, fan_out), jnp.float32))
            params.append(jnp.zeros((1, fan_out), jnp.float32))
    return tuple(params)


def actor_reference(x, params, scale, loc):
    """Pure-JAX reference for correctness checking."""
    (w1, b1, g1, be1, w2, b2, g2, be2, w3, b3) = params

    def bn(h, g, be):
        m = jnp.mean(h, axis=0, keepdims=True)
        v = jnp.mean((h - m) ** 2, axis=0, keepdims=True)
        return g * (h - m) / jnp.sqrt(v + BN_EPS) + be

    h = jnp.maximum(bn(x @ w1 + b1, g1, be1), 0.0)
    h = jnp.maximum(bn(h @ w2 + b2, g2, be2), 0.0)
    h = h @ w3 + b3
    return scale * jnp.tanh(h) + loc


if __name__ == "__main__":
    batch = 4
    state_dim = 16
    hidden_sizes = [32, 32]
    action_dim = 8

    key = jax.random.PRNGKey(0)
    k_x, k_p, k_s, k_l = jax.random.split(key, 4)

    x = jax.random.normal(k_x, (batch, state_dim), dtype=jnp.float32)
    params = init_params(k_p, state_dim, hidden_sizes, action_dim)
    # act_scale / act_loc: per-action vectors (broadcast over batch)
    scale = jax.random.uniform(k_s, (1, action_dim), minval=0.5, maxval=2.0,
                               dtype=jnp.float32)
    loc = jax.random.uniform(k_l, (1, action_dim), minval=-1.0, maxval=1.0,
                             dtype=jnp.float32)

    out = actor_forward(x, params, scale, loc, action_dim=action_dim)
    out = jax.block_until_ready(out)

    ref = actor_reference(x, params, scale, loc)
    assert out.shape == (batch, action_dim)
    assert jnp.allclose(out, ref, atol=1e-5, rtol=1e-5), "mismatch vs JAX reference"

    print("KERNEL_OK")
</pallas_src>

<mosaic_0001>
module attributes {stable_mosaic.version = 11 : i64} {
  func.func @actor_kernel(%arg0: memref<4x128xf32, #tpu.memory_space<vmem>>, %arg1: memref<3x128x128xf32, #tpu.memory_space<vmem>>, %arg2: memref<9x128xf32, #tpu.memory_space<vmem>>, %arg3: memref<4x128xf32, #tpu.memory_space<vmem>>) attributes {dimension_semantics = [], scalar_prefetch = 0 : i64, scratch_operands = 0 : i64, tpu.core_type = #tpu.core_type<tc>} {
    %c0 = arith.constant 0 : index
    %c0_0 = arith.constant 0 : index
    %0 = vector.load %arg0[%c0, %c0_0] : memref<4x128xf32, #tpu.memory_space<vmem>>, vector<4x128xf32>
    %c0_1 = arith.constant 0 : index
    %c0_2 = arith.constant 0 : index
    %c0_3 = arith.constant 0 : index
    %1 = vector.load %arg1[%c0_1, %c0_2, %c0_3] : memref<3x128x128xf32, #tpu.memory_space<vmem>>, vector<1x128x128xf32>
    %2 = vector.shape_cast %1 : vector<1x128x128xf32> to vector<128x128xf32>
    %cst = arith.constant dense<0.000000e+00> : vector<4x128xf32>
    %3 = tpu.matmul %0, %2, %cst {dimension_numbers = #tpu.dot_dimension_numbers<[1], [0], [0], [1], [0, 0, 1, 1], [], []>} : vector<4x128xf32>, vector<128x128xf32>, vector<4x128xf32> -> vector<4x128xf32>
    %c0_4 = arith.constant 0 : index
    %c0_5 = arith.constant 0 : index
    %4 = vector.load %arg2[%c0_4, %c0_5] : memref<9x128xf32, #tpu.memory_space<vmem>>, vector<1x128xf32>
    %5 = vector.broadcast %4 : vector<1x128xf32> to vector<4x128xf32>
    %6 = arith.addf %3, %5 : vector<4x128xf32>
    %cst_6 = arith.constant dense<0.000000e+00> : vector<128xf32>
    %7 = vector.multi_reduction <add>, %6, %cst_6 [0] : vector<4x128xf32> to vector<128xf32>
    %8 = vector.shape_cast %7 : vector<128xf32> to vector<1x128xf32>
    %cst_7 = arith.constant 4.000000e+00 : f32
    %9 = vector.broadcast %cst_7 : f32 to vector<1x128xf32>
    %10 = arith.divf %8, %9 : vector<1x128xf32>
    %11 = vector.broadcast %10 : vector<1x128xf32> to vector<4x128xf32>
    %12 = arith.subf %6, %11 : vector<4x128xf32>
    %13 = arith.mulf %12, %12 : vector<4x128xf32>
    %cst_8 = arith.constant dense<0.000000e+00> : vector<128xf32>
    %14 = vector.multi_reduction <add>, %13, %cst_8 [0] : vector<4x128xf32> to vector<128xf32>
    %15 = vector.shape_cast %14 : vector<128xf32> to vector<1x128xf32>
    %cst_9 = arith.constant 4.000000e+00 : f32
    %16 = vector.broadcast %cst_9 : f32 to vector<1x128xf32>
    %17 = arith.divf %15, %16 : vector<1x128xf32>
    %c1 = arith.constant 1 : index
    %c0_10 = arith.constant 0 : index
    %18 = vector.load %arg2[%c1, %c0_10] : memref<9x128xf32, #tpu.memory_space<vmem>>, vector<1x128xf32>
    %cst_11 = arith.constant 9.99999974E-6 : f32
    %19 = vector.broadcast %cst_11 : f32 to vector<1x128xf32>
    %20 = arith.addf %17, %19 : vector<1x128xf32>
    %21 = math.rsqrt %20 : vector<1x128xf32>
    %22 = arith.mulf %18, %21 : vector<1x128xf32>
    %23 = vector.broadcast %22 : vector<1x128xf32> to vector<4x128xf32>
    %24 = arith.mulf %23, %12 : vector<4x128xf32>
    %c2 = arith.constant 2 : index
    %c0_12 = arith.constant 0 : index
    %25 = vector.load %arg2[%c2, %c0_12] : memref<9x128xf32, #tpu.memory_space<vmem>>, vector<1x128xf32>
    %26 = vector.broadcast %25 : vector<1x128xf32> to vector<4x128xf32>
    %27 = arith.addf %24, %26 : vector<4x128xf32>
    %cst_13 = arith.constant 0.000000e+00 : f32
    %28 = vector.broadcast %cst_13 : f32 to vector<4x128xf32>
    %29 = arith.maximumf %27, %28 : vector<4x128xf32>
    %c1_14 = arith.constant 1 : index
    %c0_15 = arith.constant 0 : index
    %c0_16 = arith.constant 0 : index
    %30 = vector.load %arg1[%c1_14, %c0_15, %c0_16] : memref<3x128x128xf32, #tpu.memory_space<vmem>>, vector<1x128x128xf32>
    %31 = vector.shape_cast %30 : vector<1x128x128xf32> to vector<128x128xf32>
    %cst_17 = arith.constant dense<0.000000e+00> : vector<4x128xf32>
    %32 = tpu.matmul %29, %31, %cst_17 {dimension_numbers = #tpu.dot_dimension_numbers<[1], [0], [0], [1], [0, 0, 1, 1], [], []>} : vector<4x128xf32>, vector<128x128xf32>, vector<4x128xf32> -> vector<4x128xf32>
    %c3 = arith.constant 3 : index
    %c0_18 = arith.constant 0 : index
    %33 = vector.load %arg2[%c3, %c0_18] : memref<9x128xf32, #tpu.memory_space<vmem>>, vector<1x128xf32>
    %34 = vector.broadcast %33 : vector<1x128xf32> to vector<4x128xf32>
    %35 = arith.addf %32, %34 : vector<4x128xf32>
    %cst_19 = arith.constant dense<0.000000e+00> : vector<128xf32>
    %36 = vector.multi_reduction <add>, %35, %cst_19 [0] : vector<4x128xf32> to vector<128xf32>
    %37 = vector.shape_cast %36 : vector<128xf32> to vector<1x128xf32>
    %cst_20 = arith.constant 4.000000e+00 : f32
    %38 = vector.broadcast %cst_20 : f32 to vector<1x128xf32>
    %39 = arith.divf %37, %38 : vector<1x128xf32>
    %40 = vector.broadcast %39 : vector<1x128xf32> to vector<4x128xf32>
    %41 = arith.subf %35, %40 : vector<4x128xf32>
    %42 = arith.mulf %41, %41 : vector<4x128xf32>
    %cst_21 = arith.constant dense<0.000000e+00> : vector<128xf32>
    %43 = vector.multi_reduction <add>, %42, %cst_21 [0] : vector<4x128xf32> to vector<128xf32>
    %44 = vector.shape_cast %43 : vector<128xf32> to vector<1x128xf32>
    %cst_22 = arith.constant 4.000000e+00 : f32
    %45 = vector.broadcast %cst_22 : f32 to vector<1x128xf32>
    %46 = arith.divf %44, %45 : vector<1x128xf32>
    %c4 = arith.constant 4 : index
    %c0_23 = arith.constant 0 : index
    %47 = vector.load %arg2[%c4, %c0_23] : memref<9x128xf32, #tpu.memory_space<vmem>>, vector<1x128xf32>
    %cst_24 = arith.constant 9.99999974E-6 : f32
    %48 = vector.broadcast %cst_24 : f32 to vector<1x128xf32>
    %49 = arith.addf %46, %48 : vector<1x128xf32>
    %50 = math.rsqrt %49 : vector<1x128xf32>
    %51 = arith.mulf %47, %50 : vector<1x128xf32>
    %52 = vector.broadcast %51 : vector<1x128xf32> to vector<4x128xf32>
    %53 = arith.mulf %52, %41 : vector<4x128xf32>
    %c5 = arith.constant 5 : index
    %c0_25 = arith.constant 0 : index
    %54 = vector.load %arg2[%c5, %c0_25] : memref<9x128xf32, #tpu.memory_space<vmem>>, vector<1x128xf32>
    %55 = vector.broadcast %54 : vector<1x128xf32> to vector<4x128xf32>
    %56 = arith.addf %53, %55 : vector<4x128xf32>
    %cst_26 = arith.constant 0.000000e+00 : f32
    %57 = vector.broadcast %cst_26 : f32 to vector<4x128xf32>
    %58 = arith.maximumf %56, %57 : vector<4x128xf32>
    %c2_27 = arith.constant 2 : index
    %c0_28 = arith.constant 0 : index
    %c0_29 = arith.constant 0 : index
    %59 = vector.load %arg1[%c2_27, %c0_28, %c0_29] : memref<3x128x128xf32, #tpu.memory_space<vmem>>, vector<1x128x128xf32>
    %60 = vector.shape_cast %59 : vector<1x128x128xf32> to vector<128x128xf32>
    %cst_30 = arith.constant dense<0.000000e+00> : vector<4x128xf32>
    %61 = tpu.matmul %58, %60, %cst_30 {dimension_numbers = #tpu.dot_dimension_numbers<[1], [0], [0], [1], [0, 0, 1, 1], [], []>} : vector<4x128xf32>, vector<128x128xf32>, vector<4x128xf32> -> vector<4x128xf32>
    %c6 = arith.constant 6 : index
    %c0_31 = arith.constant 0 : index
    %62 = vector.load %arg2[%c6, %c0_31] : memref<9x128xf32, #tpu.memory_space<vmem>>, vector<1x128xf32>
    %63 = vector.broadcast %62 : vector<1x128xf32> to vector<4x128xf32>
    %64 = arith.addf %61, %63 : vector<4x128xf32>
    %c7 = arith.constant 7 : index
    %c0_32 = arith.constant 0 : index
    %65 = vector.load %arg2[%c7, %c0_32] : memref<9x128xf32, #tpu.memory_space<vmem>>, vector<1x128xf32>
    %66 = math.tanh %64 : vector<4x128xf32>
    %67 = vector.broadcast %65 : vector<1x128xf32> to vector<4x128xf32>
    %68 = arith.mulf %67, %66 : vector<4x128xf32>
    %c8 = arith.constant 8 : index
    %c0_33 = arith.constant 0 : index
    %69 = vector.load %arg2[%c8, %c0_33] : memref<9x128xf32, #tpu.memory_space<vmem>>, vector<1x128xf32>
    %70 = vector.broadcast %69 : vector<1x128xf32> to vector<4x128xf32>
    %71 = arith.addf %68, %70 : vector<4x128xf32>
    %c0_34 = arith.constant 0 : index
    %c0_35 = arith.constant 0 : index
    %72 = vector.load %arg3[%c0_34, %c0_35] : memref<4x128xf32, #tpu.memory_space<vmem>>, vector<4x128xf32>
    tpu.vector_store %arg3[%c0_34, %c0_35], %71 {strides = array<i32>} : memref<4x128xf32, #tpu.memory_space<vmem>>, vector<4x128xf32>,
    return
  }
}

</mosaic_0001>

<llo_original>
// kernel: actor_forward.1
$region0: #{actor_forward.1}
  #allocation0 [shape = 'u32[]', space=smem, size = 0x4, offset = 0x4, fixed_abs, tag = 'smem constant byte address 0x4 - core index']
  #allocation1 [shape = 'u32[144,128]{1,0:T(1,128)}', space=vmem, size = 0x12000, scoped, tag = 'internal scratch']
  %s0 = inlined_call_operand.vmem [shape: f32[4,128], index: 0, kind: input, shape index: {}]
  %s1 = inlined_call_operand.vmem [shape: f32[3,128,128], index: 1, kind: input, shape index: {}]
  %s2 = inlined_call_operand.vmem [shape: f32[9,128], index: 2, kind: input, shape index: {}]
  %s3 = inlined_call_operand.hbm [shape: f32[4,128], index: 3, kind: output, shape index: {}]
  %s4 = sld [smem:[#allocation0]]
  $region22: #{actor_forward.1} parent=0
    _
  %s6 = ssub.s32 1, %s4
  %s7 = scalar_select 0, %s6, %s4
  $region1: #{actor_forward.1} parent=0
    #allocation2 [shape = 'u8[2048]{0}', space=vmem, size = 0x800, scoped, tag = 'output window, operand 0, single buffered']
    #allocation3 [shape = 's32[1]{0}', space=sflag, size = 0x4, scoped, tag = 'scoped memory for actor_forward.1']
    %8 = vsyncpa [#allocation3], 0
    // Predicated region
    $region2: #{actor_forward.1} parent=1 // pred_check
      _
    $region3: #{actor_forward.1} parent=1 // pred_check_branch
      %10 = sbr.rel (0) target = $region5
    $region4: #{actor_forward.1} parent=1 // pred_region
      _
    $region5: #{actor_forward.1} parent=1 // pred_fallthru
      _
    // Predicated region
    $region6: #{actor_forward.1} parent=1 // pred_check
      _
    $region7: #{actor_forward.1} parent=1 // pred_check_branch
      %12 = sbr.rel (0) target = $region9
    $region8: #{actor_forward.1} parent=1 // pred_region
      _
    $region9: #{actor_forward.1} parent=1 // pred_fallthru
      _
    // Predicated region
    $region10: #{actor_forward.1} parent=1 // pred_check
      _
    $region11: #{actor_forward.1} parent=1 // pred_check_branch
      %14 = sbr.rel (0) target = $region13
    $region12: #{actor_forward.1} parent=1 // pred_region
      _
    $region13: #{actor_forward.1} parent=1 // pred_fallthru
      _
    %v15 = vld [vmem:[%s0] sm:$0xf]
    %v16 = vld [vmem:[%s1] sm:$0xff]
    %v17 = vld [vmem:[%s1 + $0x8] sm:$0xff]
    %v18 = vld [vmem:[%s1 + $0x10] sm:$0xff]
    %v19 = vld [vmem:[%s1 + $0x18] sm:$0xff]
    %v20 = vld [vmem:[%s1 + $0x20] sm:$0xff]
    %v21 = vld [vmem:[%s1 + $0x28] sm:$0xff]
    %v22 = vld [vmem:[%s1 + $0x30] sm:$0xff]
    %v23 = vld [vmem:[%s1 + $0x38] sm:$0xff]
    %v24 = vld [vmem:[%s1 + $0x40] sm:$0xff]
    %v25 = vld [vmem:[%s1 + $0x48] sm:$0xff]
    %v26 = vld [vmem:[%s1 + $0x50] sm:$0xff]
    %v27 = vld [vmem:[%s1 + $0x58] sm:$0xff]
    %v28 = vld [vmem:[%s1 + $0x60] sm:$0xff]
    %v29 = vld [vmem:[%s1 + $0x68] sm:$0xff]
    %v30 = vld [vmem:[%s1 + $0x70] sm:$0xff]
    %v31 = vld [vmem:[%s1 + $0x78] sm:$0xff]
    %v32 = vld [vmem:[%s2] sm:$0x1]
    %v33 = vlaneseq
    %v34 = vshrl.u32 %v33, 7
    %v35 = vsub.s32 0, %v34
    %v36 = vrot.slane %v32, %v35
    %37 = vmatprep.subr.mxu0 0.0
    %38 = vmatpush1.msra.mxu0 %v31
    %39 = vmatprep.subr.mxu0 0.0
    %40 = vmatpush1.msra.mxu0 %v30
    %41 = vmatprep.subr.mxu0 0.0
    %42 = vmatpush1.msra.mxu0 %v29
    %43 = vmatprep.subr.mxu0 0.0
    %44 = vmatpush1.msra.mxu0 %v28
    %45 = vmatprep.subr.mxu0 0.0
    %46 = vmatpush1.msra.mxu0 %v27
    %47 = vmatprep.subr.mxu0 0.0
    %48 = vmatpush1.msra.mxu0 %v26
    %49 = vmatprep.subr.mxu0 0.0
    %50 = vmatpush1.msra.mxu0 %v25
    %51 = vmatprep.subr.mxu0 0.0
    %52 = vmatpush1.msra.mxu0 %v24
    %53 = vmatprep.subr.mxu0 0.0
    %54 = vmatpush1.msra.mxu0 %v23
    %55 = vmatprep.subr.mxu0 0.0
    %56 = vmatpush1.msra.mxu0 %v22
    %57 = vmatprep.subr.mxu0 0.0
    %58 = vmatpush1.msra.mxu0 %v21
    %59 = vmatprep.subr.mxu0 0.0
    %60 = vmatpush1.msra.mxu0 %v20
    %61 = vmatprep.subr.mxu0 0.0
    %62 = vmatpush1.msra.mxu0 %v19
    %63 = vmatprep.subr.mxu0 0.0
    %64 = vmatpush1.msra.mxu0 %v18
    %65 = vmatprep.subr.mxu0 0.0
    %66 = vmatpush1.msra.mxu0 %v17
    %67 = vmatprep.subr.mxu0 0.0
    %68 = vmatpush1.msra.mxu0 %v16
    %69 = vmatprep.subr.mxu0 0.0
    %70 = vmatpush2.msra.mxu0 0.0
    %71 = vmatprep.subr.mxu0 0.0
    %72 = vmatpush2.msra.mxu0 0.0
    %73 = vmatprep.subr.mxu0 0.0
    %74 = vmatpush2.msra.mxu0 0.0
    %75 = vmatprep.subr.mxu0 0.0
    %76 = vmatpush2.msra.mxu0 0.0
    %77 = vmatprep.subr.mxu0 0.0
    %78 = vmatpush2.msra.mxu0 0.0
    %79 = vmatprep.subr.mxu0 0.0
    %80 = vmatpush2.msra.mxu0 0.0
    %81 = vmatprep.subr.mxu0 0.0
    %82 = vmatpush2.msra.mxu0 0.0
    %83 = vmatprep.subr.mxu0 0.0
    %84 = vmatpush2.msra.mxu0 0.0
    %85 = vmatprep.subr.mxu0 0.0
    %86 = vmatpush2.msra.mxu0 0.0
    %87 = vmatprep.subr.mxu0 0.0
    %88 = vmatpush2.msra.mxu0 0.0
    %89 = vmatprep.subr.mxu0 0.0
    %90 = vmatpush2.msra.mxu0 0.0
    %91 = vmatprep.subr.mxu0 0.0
    %92 = vmatpush2.msra.mxu0 0.0
    %93 = vmatprep.subr.mxu0 0.0
    %94 = vmatpush2.msra.mxu0 0.0
    %95 = vmatprep.subr.mxu0 0.0
    %96 = vmatpush2.msra.mxu0 0.0
    %97 = vmatprep.subr.mxu0 0.0
    %98 = vmatpush2.msra.mxu0 0.0
    %99 = vmatprep.subr.mxu0 0.0
    %100 = vmatpush2.msra.mxu0 0.0
    %101 = vmatprep.mubr.f32.mxu0 0.0
    %102 = vmatmul.mubr.f32.gmra.mxu0 %v15
    %v103 = vpop.f32.mrf.mxu0
    %v104 = vadd.f32 %v36, %v103
    %v105 = vpop.f32.mrf.mxu0
    %106 = vdwg.mxu0
    %vm107 = vcmask 1043456
    %v108 = vsel %vm107, %v104, 0.0
    %v109 = vrot.slane %v108, 4
    %v110 = vadd.f32 %v108, %v109
    %v111 = vrot.slane %v110, 2
    %v112 = vadd.f32 %v110, %v111
    %v113 = vrot.slane %v112, 1
    %v114 = vadd.f32 %v112, %v113
    %v115 = vrcp.pop 4.0
    %v116 = vmul.f32 %v114, %v115
    %v117 = vsub.f32 %v104, %v116
    %v118 = vmul.f32 %v117, %v117
    %v119 = vsel %vm107, %v118, 0.0
    %v120 = vrot.slane %v119, 4
    %v121 = vadd.f32 %v119, %v120
    %v122 = vrot.slane %v121, 2
    %v123 = vadd.f32 %v121, %v122
    %v124 = vrot.slane %v123, 1
    %v125 = vadd.f32 %v123, %v124
    %v126 = vmul.f32 %v125, %v115
    %v127 = vld [vmem:[%s2 + $0x1] sm:$0x1]
    %v128 = vadd.f32 %v126, 1e-05
    %v129 = vrsqrt.pop %v128
    %v130 = vmul.f32 %v127, %v129
    %v131 = vlaneseq
    %v132 = vshrl.u32 %v131, 7
    %v133 = vsub.s32 0, %v132
    %v134 = vrot.slane %v130, %v133
    %v135 = vmul.f32 %v134, %v117
    %v136 = vld [vmem:[%s2 + $0x2] sm:$0x1]
    %v137 = vlaneseq
    %v138 = vshrl.u32 %v137, 7
    %v139 = vsub.s32 0, %v138
    %v140 = vrot.slane %v136, %v139
    %v141 = vadd.f32 %v135, %v140
    %v142 = vmax.f32 %v141, 0.0
    %s143 = scalar_lea.vmem %s1, 128
    %v144 = vld [vmem:[%s143] sm:$0xff]
    %v145 = vld [vmem:[%s143 + $0x8] sm:$0xff]
    %v146 = vld [vmem:[%s143 + $0x10] sm:$0xff]
    %v147 = vld [vmem:[%s143 + $0x18] sm:$0xff]
    %v148 = vld [vmem:[%s143 + $0x20] sm:$0xff]
    %v149 = vld [vmem:[%s143 + $0x28] sm:$0xff]
    %v150 = vld [vmem:[%s143 + $0x30] sm:$0xff]
    %v151 = vld [vmem:[%s143 + $0x38] sm:$0xff]
    %v152 = vld [vmem:[%s143 + $0x40] sm:$0xff]
    %v153 = vld [vmem:[%s143 + $0x48] sm:$0xff]
    %v154 = vld [vmem:[%s143 + $0x50] sm:$0xff]
    %v155 = vld [vmem:[%s143 + $0x58] sm:$0xff]
    %v156 = vld [vmem:[%s143 + $0x60] sm:$0xff]
    %v157 = vld [vmem:[%s143 + $0x68] sm:$0xff]
    %v158 = vld [vmem:[%s143 + $0x70] sm:$0xff]
    %v159 = vld [vmem:[%s143 + $0x78] sm:$0xff]
    %v160 = vld [vmem:[%s2 + $0x3] sm:$0x1]
    %v161 = vlaneseq
    %v162 = vshrl.u32 %v161, 7
    %v163 = vsub.s32 0, %v162
    %v164 = vrot.slane %v160, %v163
    %165 = vmatprep.subr.mxu0 0.0
    %166 = vmatpush1.msra.mxu0 %v159
    %167 = vmatprep.subr.mxu0 0.0
    %168 = vmatpush1.msra.mxu0 %v158
    %169 = vmatprep.subr.mxu0 0.0
    %170 = vmatpush1.msra.mxu0 %v157
    %171 = vmatprep.subr.mxu0 0.0
    %172 = vmatpush1.msra.mxu0 %v156
    %173 = vmatprep.subr.mxu0 0.0
    %174 = vmatpush1.msra.mxu0 %v155
    %175 = vmatprep.subr.mxu0 0.0
    %176 = vmatpush1.msra.mxu0 %v154
    %177 = vmatprep.subr.mxu0 0.0
    %178 = vmatpush1.msra.mxu0 %v153
    %179 = vmatprep.subr.mxu0 0.0
    %180 = vmatpush1.msra.mxu0 %v152
    %181 = vmatprep.subr.mxu0 0.0
    %182 = vmatpush1.msra.mxu0 %v151
    %183 = vmatprep.subr.mxu0 0.0
    %184 = vmatpush1.msra.mxu0 %v150
    %185 = vmatprep.subr.mxu0 0.0
    %186 = vmatpush1.msra.mxu0 %v149
    %187 = vmatprep.subr.mxu0 0.0
    %188 = vmatpush1.msra.mxu0 %v148
    %189 = vmatprep.subr.mxu0 0.0
    %190 = vmatpush1.msra.mxu0 %v147
    %191 = vmatprep.subr.mxu0 0.0
    %192 = vmatpush1.msra.mxu0 %v146
    %193 = vmatprep.subr.mxu0 0.0
    %194 = vmatpush1.msra.mxu0 %v145
    %195 = vmatprep.subr.mxu0 0.0
    %196 = vmatpush1.msra.mxu0 %v144
    %197 = vmatprep.subr.mxu0 0.0
    %198 = vmatpush2.msra.mxu0 0.0
    %199 = vmatprep.subr.mxu0 0.0
    %200 = vmatpush2.msra.mxu0 0.0
    %201 = vmatprep.subr.mxu0 0.0
    %202 = vmatpush2.msra.mxu0 0.0
    %203 = vmatprep.subr.mxu0 0.0
    %204 = vmatpush2.msra.mxu0 0.0
    %205 = vmatprep.subr.mxu0 0.0
    %206 = vmatpush2.msra.mxu0 0.0
    %207 = vmatprep.subr.mxu0 0.0
    %208 = vmatpush2.msra.mxu0 0.0
    %209 = vmatprep.subr.mxu0 0.0
    %210 = vmatpush2.msra.mxu0 0.0
    %211 = vmatprep.subr.mxu0 0.0
    %212 = vmatpush2.msra.mxu0 0.0
    %213 = vmatprep.subr.mxu0 0.0
    %214 = vmatpush2.msra.mxu0 0.0
    %215 = vmatprep.subr.mxu0 0.0
    %216 = vmatpush2.msra.mxu0 0.0
    %217 = vmatprep.subr.mxu0 0.0
    %218 = vmatpush2.msra.mxu0 0.0
    %219 = vmatprep.subr.mxu0 0.0
    %220 = vmatpush2.msra.mxu0 0.0
    %221 = vmatprep.subr.mxu0 0.0
    %222 = vmatpush2.msra.mxu0 0.0
    %223 = vmatprep.subr.mxu0 0.0
    %224 = vmatpush2.msra.mxu0 0.0
    %225 = vmatprep.subr.mxu0 0.0
    %226 = vmatpush2.msra.mxu0 0.0
    %227 = vmatprep.subr.mxu0 0.0
    %228 = vmatpush2.msra.mxu0 0.0
    %229 = vmatprep.mubr.f32.mxu0 0.0
    %230 = vmatmul.mubr.f32.gmra.mxu0 %v142
    %v231 = vpop.f32.mrf.mxu0
    %v232 = vadd.f32 %v164, %v231
    %v233 = vpop.f32.mrf.mxu0
    %234 = vdwg.mxu0
    %v235 = vsel %vm107, %v232, 0.0
    %v236 = vrot.slane %v235, 4
    %v237 = vadd.f32 %v235, %v236
    %v238 = vrot.slane %v237, 2
    %v239 = vadd.f32 %v237, %v238
    %v240 = vrot.slane %v239, 1
    %v241 = vadd.f32 %v239, %v240
    %v242 = vmul.f32 %v241, %v115
    %v243 = vsub.f32 %v232, %v242
    %v244 = vmul.f32 %v243, %v243
    %v245 = vsel %vm107, %v244, 0.0
    %v246 = vrot.slane %v245, 4
    %v247 = vadd.f32 %v245, %v246
    %v248 = vrot.slane %v247, 2
    %v249 = vadd.f32 %v247, %v248
    %v250 = vrot.slane %v249, 1
    %v251 = vadd.f32 %v249, %v250
    %v252 = vmul.f32 %v251, %v115
    %v253 = vld [vmem:[%s2 + $0x4] sm:$0x1]
    %v254 = vadd.f32 %v252, 1e-05
    %v255 = vrsqrt.pop %v254
    %v256 = vmul.f32 %v253, %v255
    %v257 = vlaneseq
    %v258 = vshrl.u32 %v257, 7
    %v259 = vsub.s32 0, %v258
    %v260 = vrot.slane %v256, %v259
    %v261 = vmul.f32 %v260, %v243
    %v262 = vld [vmem:[%s2 + $0x5] sm:$0x1]
    %v263 = vlaneseq
    %v264 = vshrl.u32 %v263, 7
    %v265 = vsub.s32 0, %v264
    %v266 = vrot.slane %v262, %v265
    %v267 = vadd.f32 %v261, %v266
    %v268 = vmax.f32 %v267, 0.0
    %s269 = scalar_lea.vmem %s1, 256
    %v270 = vld [vmem:[%s269] sm:$0xff]
    %v271 = vld [vmem:[%s269 + $0x8] sm:$0xff]
    %v272 = vld [vmem:[%s269 + $0x10] sm:$0xff]
    %v273 = vld [vmem:[%s269 + $0x18] sm:$0xff]
    %v274 = vld [vmem:[%s269 + $0x20] sm:$0xff]
    %v275 = vld [vmem:[%s269 + $0x28] sm:$0xff]
    %v276 = vld [vmem:[%s269 + $0x30] sm:$0xff]
    %v277 = vld [vmem:[%s269 + $0x38] sm:$0xff]
    %v278 = vld [vmem:[%s269 + $0x40] sm:$0xff]
    %v279 = vld [vmem:[%s269 + $0x48] sm:$0xff]
    %v280 = vld [vmem:[%s269 + $0x50] sm:$0xff]
    %v281 = vld [vmem:[%s269 + $0x58] sm:$0xff]
    %v282 = vld [vmem:[%s269 + $0x60] sm:$0xff]
    %v283 = vld [vmem:[%s269 + $0x68] sm:$0xff]
    %v284 = vld [vmem:[%s269 + $0x70] sm:$0xff]
    %v285 = vld [vmem:[%s269 + $0x78] sm:$0xff]
    %v286 = vld [vmem:[%s2 + $0x6] sm:$0x1]
    %v287 = vlaneseq
    %v288 = vshrl.u32 %v287, 7
    %v289 = vsub.s32 0, %v288
    %v290 = vrot.slane %v286, %v289
    %291 = vmatprep.subr.mxu0 0.0
    %292 = vmatpush1.msra.mxu0 %v285
    %293 = vmatprep.subr.mxu0 0.0
    %294 = vmatpush1.msra.mxu0 %v284
    %295 = vmatprep.subr.mxu0 0.0
    %296 = vmatpush1.msra.mxu0 %v283
    %297 = vmatprep.subr.mxu0 0.0
    %298 = vmatpush1.msra.mxu0 %v282
    %299 = vmatprep.subr.mxu0 0.0
    %300 = vmatpush1.msra.mxu0 %v281
    %301 = vmatprep.subr.mxu0 0.0
    %302 = vmatpush1.msra.mxu0 %v280
    %303 = vmatprep.subr.mxu0 0.0
    %304 = vmatpush1.msra.mxu0 %v279
    %305 = vmatprep.subr.mxu0 0.0
    %306 = vmatpush1.msra.mxu0 %v278
    %307 = vmatprep.subr.mxu0 0.0
    %308 = vmatpush1.msra.mxu0 %v277
    %309 = vmatprep.subr.mxu0 0.0
    %310 = vmatpush1.msra.mxu0 %v276
    %311 = vmatprep.subr.mxu0 0.0
    %312 = vmatpush1.msra.mxu0 %v275
    %313 = vmatprep.subr.mxu0 0.0
    %314 = vmatpush1.msra.mxu0 %v274
    %315 = vmatprep.subr.mxu0 0.0
    %316 = vmatpush1.msra.mxu0 %v273
    %317 = vmatprep.subr.mxu0 0.0
    %318 = vmatpush1.msra.mxu0 %v272
    %319 = vmatprep.subr.mxu0 0.0
    %320 = vmatpush1.msra.mxu0 %v271
    %321 = vmatprep.subr.mxu0 0.0
    %322 = vmatpush1.msra.mxu0 %v270
    %323 = vmatprep.subr.mxu0 0.0
    %324 = vmatpush2.msra.mxu0 0.0
    %325 = vmatprep.subr.mxu0 0.0
    %326 = vmatpush2.msra.mxu0 0.0
    %327 = vmatprep.subr.mxu0 0.0
    %328 = vmatpush2.msra.mxu0 0.0
    %329 = vmatprep.subr.mxu0 0.0
    %330 = vmatpush2.msra.mxu0 0.0
    %331 = vmatprep.subr.mxu0 0.0
    %332 = vmatpush2.msra.mxu0 0.0
    %333 = vmatprep.subr.mxu0 0.0
    %334 = vmatpush2.msra.mxu0 0.0
    %335 = vmatprep.subr.mxu0 0.0
    %336 = vmatpush2.msra.mxu0 0.0
    %337 = vmatprep.subr.mxu0 0.0
    %338 = vmatpush2.msra.mxu0 0.0
    %339 = vmatprep.subr.mxu0 0.0
    %340 = vmatpush2.msra.mxu0 0.0
    %341 = vmatprep.subr.mxu0 0.0
    %342 = vmatpush2.msra.mxu0 0.0
    %343 = vmatprep.subr.mxu0 0.0
    %344 = vmatpush2.msra.mxu0 0.0
    %345 = vmatprep.subr.mxu0 0.0
    %346 = vmatpush2.msra.mxu0 0.0
    %347 = vmatprep.subr.mxu0 0.0
    %348 = vmatpush2.msra.mxu0 0.0
    %349 = vmatprep.subr.mxu0 0.0
    %350 = vmatpush2.msra.mxu0 0.0
    %351 = vmatprep.subr.mxu0 0.0
    %352 = vmatpush2.msra.mxu0 0.0
    %353 = vmatprep.subr.mxu0 0.0
    %354 = vmatpush2.msra.mxu0 0.0
    %355 = vmatprep.mubr.f32.mxu0 0.0
    %356 = vmatmul.mubr.f32.gmra.mxu0 %v268
    %v357 = vpop.f32.mrf.mxu0
    %v358 = vadd.f32 %v290, %v357
    %v359 = vpop.f32.mrf.mxu0
    %360 = vdwg.mxu0
    %v361 = vld [vmem:[%s2 + $0x7] sm:$0x1]
    %v362 = vtanh.pop %v358
    %v363 = vlaneseq
    %v364 = vshrl.u32 %v363, 7
    %v365 = vsub.s32 0, %v364
    %v366 = vrot.slane %v361, %v365
    %v367 = vmul.f32 %v366, %v362
    %v368 = vld [vmem:[%s2 + $0x8] sm:$0x1]
    %v369 = vlaneseq
    %v370 = vshrl.u32 %v369, 7
    %v371 = vsub.s32 0, %v370
    %v372 = vrot.slane %v368, %v371
    %v373 = vadd.f32 %v367, %v372
    %374 = vst [vmem:[#allocation2] sm:$0xf] %v373
    // Predicated region
    $region14: #{actor_forward.1} parent=1 // pred_check
      _
    $region15: #{actor_forward.1} parent=1 // pred_check_branch
      %376 = sbr.rel (0) target = $region17
    $region16: #{actor_forward.1} parent=1 // pred_region
      %s378 = ssub.s32 64, 64
      %379 = vsyncadd [#allocation3], %s378
      %s381 = sshll.u32 [#allocation2], 4
      %s382 = int_to_ptr.vmem [resolvable:$true] %s381
      %384 = dma.vmem_to_hbm [thread:$0]  %s382, 64, %s3, [#allocation3]
    $region17: #{actor_forward.1} parent=1 // pred_fallthru
      _
    // Predicated region
    $region18: #{actor_forward.1} parent=1 // pred_check
      _
    $region19: #{actor_forward.1} parent=1 // pred_check_branch
      %386 = sbr.rel (0) target = $region21
    $region20: #{actor_forward.1} parent=1 // pred_region
      %387 = dma.done [#allocation3], 64
    $region21: #{actor_forward.1} parent=1 // pred_fallthru
      _
    %388 = vsyncpa [#allocation3], 1

</llo_original>
